<compile_context>
chip_gen: v5e
topology: v5e:2x2
jax: 0.10.0
libtpu: 0.0.40
codegen_flags: <defaults>
</compile_context>

<pallas_src>
import functools

import jax
import jax.numpy as jnp
from jax.experimental import pallas as pl
from jax.experimental.pallas import tpu as pltpu


# ---------------------------------------------------------------------------
# helpers
# ---------------------------------------------------------------------------
def _focal_pow(x, gamma):
    """x ** gamma; integer gamma as explicit multiplies (EUP-free, NaN-safe)."""
    g = float(gamma)
    if g == int(g) and 0 <= int(g) <= 8:
        n = int(g)
        if n == 0:
            return jnp.ones_like(x)
        r = x
        for _ in range(n - 1):
            r = r * x
        return r
    # Generic fallback: clamp the base so exp(g*log(x)) never sees a tiny
    # negative produced by rounding (NaN hazard of the naive formulation).
    return jnp.power(jnp.maximum(x, 0.0), g)


def _tile_rows(nrows, ncols, itemsize, *, target_bytes=4 * 1024 * 1024,
               max_rows=4096):
    """Pick the batch-tile height: largest multiple of 8 keeping one input tile
    around `target_bytes` (v7x-safe with double buffering), capped at max_rows.
    Returns (tile_rows, num_tiles, padded_rows)."""
    cap = (target_bytes // max(1, ncols * itemsize)) // 8 * 8
    cap = max(8, min(max_rows, cap))
    if nrows <= cap:
        return nrows, 1, nrows          # single tile; block == full array dims
    padded = ((nrows + cap - 1) // cap) * cap
    return cap, padded // cap, padded


# ---------------------------------------------------------------------------
# Kernels
# ---------------------------------------------------------------------------
def _softmax_focal_kernel(logits_ref, target_ref, out_ref, acc_ref, *,
                          gamma, alpha, eps, total_rows):
    i = pl.program_id(0)

    @pl.when(i == 0)
    def _():
        acc_ref[0, 0] = jnp.float32(0.0)

    x = logits_ref[...].astype(jnp.float32)             # (TB, C)
    t = target_ref[...]                                 # (TB, 1) int32
    tb, c = x.shape

    # The one-hot mask zeroes every non-target column, so only compute the
    # focal term at the target class via log-softmax (no full (B,C) log/pow/div).
    m = jnp.max(x, axis=-1, keepdims=True)              # (TB, 1)
    e = jnp.exp(x - m)                                  # (TB, C): only full-tile EUP op
    lse = jnp.log(jnp.sum(e, axis=-1, keepdims=True))   # (TB, 1)
    classes = jax.lax.broadcasted_iota(jnp.int32, (tb, c), 1)
    one_hot = (classes == t).astype(jnp.float32)
    x_t = jnp.sum(one_hot * x, axis=-1, keepdims=True)  # (TB, 1) gather of target logit
    logp_t = (x_t - m) - lse                            # (TB, 1)
    p_t = jnp.exp(logp_t)
    # Match the reference formula exactly: log(p + eps), gamma=2 -> square.
    per_row = -alpha * _focal_pow(1.0 - p_t, gamma) * jnp.log(p_t + eps)

    # Mask rows added only to pad the last tile.
    row = i * tb + jax.lax.broadcasted_iota(jnp.int32, (tb, 1), 0)
    per_row = jnp.where(row < total_rows, per_row, 0.0)

    acc_ref[0, 0] += jnp.sum(per_row)

    @pl.when(i == pl.num_programs(0) - 1)
    def _():
        out_ref[0, 0] = acc_ref[0, 0] / jnp.float32(total_rows)   # .mean() over batch


def _sigmoid_focal_kernel(logits_ref, target_ref, out_ref, acc_ref, *,
                          gamma, alpha, eps, total_elems):
    i = pl.program_id(0)

    @pl.when(i == 0)
    def _():
        acc_ref[0, 0] = jnp.float32(0.0)

    x = logits_ref[...].astype(jnp.float32)              # (TB, 128) lane-dense
    y = target_ref[...].astype(jnp.float32)              # (TB, 128) multi-hot
    tb, w = x.shape

    # Exact sigmoid (so the f32 loss matches the reference to ~1e-7); with
    # gamma=2 as squares the only transcendentals left are exp + 2 logs/elem.
    p = 1.0 / (1.0 + jnp.exp(-x))
    loss = -alpha * y * _focal_pow(1.0 - p, gamma) * jnp.log(p + eps)
    loss = loss - (1.0 - alpha) * (1.0 - y) * _focal_pow(p, gamma) * jnp.log(1.0 - p + eps)

    # Mask the tail padding added to make the flattened array lane/tile aligned.
    row = jax.lax.broadcasted_iota(jnp.int32, (tb, w), 0)
    lane = jax.lax.broadcasted_iota(jnp.int32, (tb, w), 1)
    flat = (i * tb + row) * w + lane
    loss = jnp.where(flat < total_elems, loss, 0.0)

    acc_ref[0, 0] += jnp.sum(loss)

    @pl.when(i == pl.num_programs(0) - 1)
    def _():
        out_ref[0, 0] = acc_ref[0, 0] / jnp.float32(total_elems)  # .mean() over all


# ---------------------------------------------------------------------------
# Wrapper (parameter setup / layout plumbing in plain JAX)
# ---------------------------------------------------------------------------
def focal_loss(logits, target, *, num_labels, activation_type="softmax",
               gamma=2.0, alpha=0.25, epsilon=1e-9, max_tile_rows=4096):
    """Pallas equivalent of FocalLoss.forward. Returns a scalar (mean loss)."""
    assert logits.shape[-1] == num_labels
    B, C = logits.shape
    itemsize = jnp.dtype(logits.dtype).itemsize

    if activation_type == "softmax":
        tgt = target.astype(jnp.int32).reshape(B, 1)
        tb, grid, b_pad = _tile_rows(B, C, itemsize, max_rows=max_tile_rows)
        if b_pad != B:
            logits = jnp.pad(logits, ((0, b_pad - B), (0, 0)))
            tgt = jnp.pad(tgt, ((0, b_pad - B), (0, 0)))
        kernel = functools.partial(_softmax_focal_kernel, gamma=gamma,
                                   alpha=alpha, eps=epsilon, total_rows=B)
        in_specs = [pl.BlockSpec((tb, C), lambda i: (i, 0)),
                    pl.BlockSpec((tb, 1), lambda i: (i, 0))]
        args = (logits, tgt)
    elif activation_type == "sigmoid":
        # Elementwise + global sum: flatten to a lane-dense (rows, 128) slab so
        # small num_labels does not leave most of each vreg masked off.
        W = 128
        n = B * C
        rows = pl.cdiv(n, W)
        tb, grid, r_pad = _tile_rows(rows, W, itemsize, max_rows=max_tile_rows)
        pad = r_pad * W - n
        x = logits.reshape(-1)
        y = target.reshape(-1)
        if pad:
            x = jnp.pad(x, (0, pad))
            y = jnp.pad(y, (0, pad))
        x = x.reshape(r_pad, W)
        y = y.reshape(r_pad, W)
        kernel = functools.partial(_sigmoid_focal_kernel, gamma=gamma,
                                   alpha=alpha, eps=epsilon, total_elems=n)
        in_specs = [pl.BlockSpec((tb, W), lambda i: (i, 0)),
                    pl.BlockSpec((tb, W), lambda i: (i, 0))]
        args = (x, y)
    else:
        raise ValueError(activation_type)

    out = pl.pallas_call(
        kernel,
        out_shape=jax.ShapeDtypeStruct((1, 1), jnp.float32),
        grid_spec=pltpu.PrefetchScalarGridSpec(
            num_scalar_prefetch=0,
            grid=(grid,),
            in_specs=in_specs,
            out_specs=pl.BlockSpec(memory_space=pltpu.MemorySpace.SMEM),
            scratch_shapes=[pltpu.SMEM((1, 1), jnp.float32)]),
        compiler_params=pltpu.CompilerParams(
            # Reduction into one accumulator -> sequential grid axis.
            # TODO(synk): v7x 2-TC variant: emit per-tile partial sums with
            # dimension_semantics=("parallel",) and finish the mean in JAX.
            dimension_semantics=("arbitrary",),
            vmem_limit_bytes=32 * 1024 * 1024),
    )(*args)
    return out[0, 0]


# ---------------------------------------------------------------------------
# Pure-JAX reference (matches the PyTorch module semantics)
# ---------------------------------------------------------------------------
def _ref_softmax(logits, target, num_labels, gamma=2.0, alpha=0.25, eps=1e-9):
    one_hot = jax.nn.one_hot(target, num_labels, dtype=jnp.float32)
    p = jax.nn.softmax(logits.astype(jnp.float32), axis=-1)
    loss = -alpha * one_hot * jnp.power(1.0 - p, gamma) * jnp.log(p + eps)
    return jnp.mean(jnp.sum(loss, axis=1))


def _ref_sigmoid(logits, target, gamma=2.0, alpha=0.25, eps=1e-9):
    p = jax.nn.sigmoid(logits.astype(jnp.float32))
    y = target.astype(jnp.float32)
    loss = -alpha * y * jnp.power(1.0 - p, gamma) * jnp.log(p + eps)
    loss += -(1.0 - alpha) * (1.0 - y) * jnp.power(p, gamma) * jnp.log(1.0 - p + eps)
    return jnp.mean(loss)


if __name__ == "__main__":
    key = jax.random.PRNGKey(0)
    k1, k2, k3, k4, k5, k6 = jax.random.split(key, 6)

    # --- small shapes, single tile ---
    batch, num_labels = 8, 16
    logits = jax.random.normal(k1, (batch, num_labels), dtype=jnp.float32)
    target = jax.random.randint(k2, (batch,), 0, num_labels, dtype=jnp.int32)

    out = focal_loss(logits, target, num_labels=num_labels,
                     activation_type="softmax")
    out = jax.block_until_ready(out)
    ref = _ref_softmax(logits, target, num_labels)
    assert jnp.allclose(out, ref, atol=1e-5, rtol=1e-5), (out, ref)

    multi_hot = (jax.random.uniform(k3, (batch, num_labels)) > 0.5).astype(jnp.float32)
    out_s = focal_loss(logits, multi_hot, num_labels=num_labels,
                       activation_type="sigmoid")
    out_s = jax.block_until_ready(out_s)
    ref_s = _ref_sigmoid(logits, multi_hot)
    assert jnp.allclose(out_s, ref_s, atol=1e-5, rtol=1e-5), (out_s, ref_s)

    # --- exercise the tiled / accumulating path (grid > 1, padded last tile) ---
    b2, c2 = 20, 64
    logits2 = jax.random.normal(k4, (b2, c2), dtype=jnp.float32)
    target2 = jax.random.randint(k5, (b2,), 0, c2, dtype=jnp.int32)
    out2 = focal_loss(logits2, target2, num_labels=c2,
                      activation_type="softmax", max_tile_rows=8)
    out2 = jax.block_until_ready(out2)
    ref2 = _ref_softmax(logits2, target2, c2)
    assert jnp.allclose(out2, ref2, atol=1e-5, rtol=1e-5), (out2, ref2)

    multi_hot2 = (jax.random.uniform(k6, (b2, c2)) > 0.5).astype(jnp.float32)
    out2_s = focal_loss(logits2, multi_hot2, num_labels=c2,
                        activation_type="sigmoid", max_tile_rows=8)
    out2_s = jax.block_until_ready(out2_s)
    ref2_s = _ref_sigmoid(logits2, multi_hot2)
    assert jnp.allclose(out2_s, ref2_s, atol=1e-5, rtol=1e-5), (out2_s, ref2_s)

    print("KERNEL_OK")
</pallas_src>

<mosaic_0001>
module attributes {stable_mosaic.version = 11 : i64} {
  func.func @_softmax_focal_kernel(%arg0: i32, %arg1: memref<8x16xf32, #tpu.memory_space<vmem>>, %arg2: memref<8x1xi32, #tpu.memory_space<vmem>>, %arg3: memref<1x1xf32, #tpu.memory_space<smem>>, %arg4: memref<1x1xf32, #tpu.memory_space<smem>>) attributes {dimension_semantics = [#tpu.dimension_semantics<arbitrary>], iteration_bounds = array<i64: 1>, scalar_prefetch = 0 : i64, scratch_operands = 1 : i64, tpu.core_type = #tpu.core_type<tc>, window_params = [{transform_indices = @transform_0, window_bounds = array<i64: 8, 16>}, {transform_indices = @transform_1, window_bounds = array<i64: 8, 1>}, {transform_indices = @transform_2, window_bounds = array<i64: 1, 1>}]} {
    %c0_i32 = arith.constant 0 : i32
    %0 = arith.cmpi eq, %arg0, %c0_i32 : i32
    %1 = arith.extui %0 : i1 to i32
    %c0_i32_0 = arith.constant 0 : i32
    %2 = arith.cmpi ne, %1, %c0_i32_0 : i32
    scf.if %2 {
      %cst_18 = arith.constant 0.000000e+00 : f32
      %c0_19 = arith.constant 0 : index
      %c0_20 = arith.constant 0 : index
      %51 = memref.load %arg4[%c0_19, %c0_20] : memref<1x1xf32, #tpu.memory_space<smem>>
      memref.store %cst_18, %arg4[%c0_19, %c0_20] : memref<1x1xf32, #tpu.memory_space<smem>>
    } else {
    }
    %c0 = arith.constant 0 : index
    %c0_1 = arith.constant 0 : index
    %3 = vector.load %arg1[%c0, %c0_1] : memref<8x16xf32, #tpu.memory_space<vmem>>, vector<8x16xf32>
    %c0_2 = arith.constant 0 : index
    %c0_3 = arith.constant 0 : index
    %4 = vector.load %arg2[%c0_2, %c0_3] : memref<8x1xi32, #tpu.memory_space<vmem>>, vector<8x1xi32>
    %cst = arith.constant dense<0xFF800000> : vector<8xf32>
    %5 = vector.multi_reduction <maximumf>, %3, %cst [1] : vector<8x16xf32> to vector<8xf32>
    %6 = vector.shape_cast %5 : vector<8xf32> to vector<8x1xf32>
    %7 = vector.broadcast %6 : vector<8x1xf32> to vector<8x16xf32>
    %8 = arith.subf %3, %7 : vector<8x16xf32>
    %9 = math.exp %8 : vector<8x16xf32>
    %cst_4 = arith.constant dense<0.000000e+00> : vector<8xf32>
    %10 = vector.multi_reduction <add>, %9, %cst_4 [1] : vector<8x16xf32> to vector<8xf32>
    %11 = vector.shape_cast %10 : vector<8xf32> to vector<8x1xf32>
    %12 = math.log %11 : vector<8x1xf32>
    %13 = tpu.iota {dimensions = array<i32: 1>} : vector<8x16xi32>
    %14 = vector.broadcast %4 : vector<8x1xi32> to vector<8x16xi32>
    %15 = arith.cmpi eq, %13, %14 : vector<8x16xi32>
    %16 = arith.extui %15 : vector<8x16xi1> to vector<8x16xi32>
    %17 = arith.sitofp %16 : vector<8x16xi32> to vector<8x16xf32>
    %18 = arith.mulf %17, %3 : vector<8x16xf32>
    %cst_5 = arith.constant dense<0.000000e+00> : vector<8xf32>
    %19 = vector.multi_reduction <add>, %18, %cst_5 [1] : vector<8x16xf32> to vector<8xf32>
    %20 = vector.shape_cast %19 : vector<8xf32> to vector<8x1xf32>
    %21 = arith.subf %20, %6 : vector<8x1xf32>
    %22 = arith.subf %21, %12 : vector<8x1xf32>
    %23 = math.exp %22 : vector<8x1xf32>
    %cst_6 = arith.constant 1.000000e+00 : f32
    %24 = vector.broadcast %cst_6 : f32 to vector<8x1xf32>
    %25 = arith.subf %24, %23 : vector<8x1xf32>
    %26 = arith.mulf %25, %25 : vector<8x1xf32>
    %cst_7 = arith.constant -2.500000e-01 : f32
    %27 = vector.broadcast %cst_7 : f32 to vector<8x1xf32>
    %28 = arith.mulf %27, %26 : vector<8x1xf32>
    %cst_8 = arith.constant 9.99999971E-10 : f32
    %29 = vector.broadcast %cst_8 : f32 to vector<8x1xf32>
    %30 = arith.addf %23, %29 : vector<8x1xf32>
    %31 = math.log %30 : vector<8x1xf32>
    %32 = arith.mulf %28, %31 : vector<8x1xf32>
    %c8_i32 = arith.constant 8 : i32
    %33 = arith.muli %arg0, %c8_i32 : i32
    %34 = tpu.iota {dimensions = array<i32: 0>} : vector<8x1xi32>
    %35 = vector.broadcast %33 : i32 to vector<8x1xi32>
    %36 = arith.addi %35, %34 : vector<8x1xi32>
    %c8_i32_9 = arith.constant 8 : i32
    %37 = vector.broadcast %c8_i32_9 : i32 to vector<8x1xi32>
    %38 = arith.cmpi slt, %36, %37 : vector<8x1xi32>
    %cst_10 = arith.constant 0.000000e+00 : f32
    %39 = vector.broadcast %cst_10 : f32 to vector<8x1xf32>
    %40 = arith.select %38, %32, %39 : vector<8x1xi1>, vector<8x1xf32>
    %c0_11 = arith.constant 0 : index
    %c0_12 = arith.constant 0 : index
    %41 = memref.load %arg4[%c0_11, %c0_12] : memref<1x1xf32, #tpu.memory_space<smem>>
    %42 = vector.shape_cast %40 : vector<8x1xf32> to vector<1x8x1xf32>
    %cst_13 = arith.constant dense<0.000000e+00> : vector<1xf32>
    %43 = vector.multi_reduction <add>, %42, %cst_13 [1, 2] : vector<1x8x1xf32> to vector<1xf32>
    %44 = vector.shape_cast %43 : vector<1xf32> to vector<1x1x1xf32>
    %45 = vector.extract %44[0, 0, 0] : f32 from vector<1x1x1xf32>
    %46 = arith.addf %41, %45 : f32
    %c0_14 = arith.constant 0 : index
    %c0_15 = arith.constant 0 : index
    %47 = memref.load %arg4[%c0_14, %c0_15] : memref<1x1xf32, #tpu.memory_space<smem>>
    memref.store %46, %arg4[%c0_14, %c0_15] : memref<1x1xf32, #tpu.memory_space<smem>>
    %c0_i32_16 = arith.constant 0 : i32
    %48 = arith.cmpi eq, %arg0, %c0_i32_16 : i32
    %49 = arith.extui %48 : i1 to i32
    %c0_i32_17 = arith.constant 0 : i32
    %50 = arith.cmpi ne, %49, %c0_i32_17 : i32
    scf.if %50 {
      %c0_18 = arith.constant 0 : index
      %c0_19 = arith.constant 0 : index
      %51 = memref.load %arg4[%c0_18, %c0_19] : memref<1x1xf32, #tpu.memory_space<smem>>
      %cst_20 = arith.constant 8.000000e+00 : f32
      %52 = arith.divf %51, %cst_20 : f32
      %c0_21 = arith.constant 0 : index
      %c0_22 = arith.constant 0 : index
      %53 = memref.load %arg3[%c0_21, %c0_22] : memref<1x1xf32, #tpu.memory_space<smem>>
      memref.store %52, %arg3[%c0_21, %c0_22] : memref<1x1xf32, #tpu.memory_space<smem>>
    } else {
    }
    return
  }
  func.func @transform_0(%arg0: i32) -> (i32, i32) {
    %c0_i32 = arith.constant 0 : i32
    %c0_i32_0 = arith.constant 0 : i32
    return %arg0, %c0_i32 : i32, i32
  }
  func.func @transform_1(%arg0: i32) -> (i32, i32) {
    %c0_i32 = arith.constant 0 : i32
    %c0_i32_0 = arith.constant 0 : i32
    return %arg0, %c0_i32 : i32, i32
  }
  func.func @transform_2(%arg0: i32) -> (i32, i32) {
    %c0_i32 = arith.constant 0 : i32
    %c0_i32_0 = arith.constant 0 : i32
    %c0_i32_1 = arith.constant 0 : i32
    return %c0_i32, %c0_i32_0 : i32, i32
  }
}

</mosaic_0001>

<llo_original>
// kernel: tpu_custom_call.1
$region0: #{tpu_custom_call.1}
  #allocation0 [shape = 'u32[]', space=smem, size = 0x4, offset = 0x4, fixed_abs, tag = 'smem constant byte address 0x4 - core index']
  #allocation1 [shape = 'u32[72,128]{1,0:T(1,128)}', space=vmem, size = 0x9000, scoped, tag = 'internal scratch']
  #allocation2 [shape = 'f32[1,1]{1,0:T(1,128)}', space=smem, size = 0x200, scoped, tag = 'scratch operand']
  %s0 = inlined_call_operand.vmem [shape: f32[8,16], index: 0, kind: input, shape index: {}]
  %s1 = inlined_call_operand.vmem [shape: s32[8,1], index: 1, kind: input, shape index: {}]
  %s2 = inlined_call_operand.hbm [shape: f32[1,1], index: 2, kind: output, shape index: {}]
  %s3 = sld [smem:[#allocation0]]
  $region26: #{tpu_custom_call.1} parent=0
    _
  %s5 = ssub.s32 1, %s3
  %s6 = scalar_select 0, %s5, %s3
  $region1: #{tpu_custom_call.1} parent=0
    #allocation3 [shape = 'u8[512]{0}', space=smem, size = 0x200, scoped, tag = 'output window, operand 0, single buffered']
    #allocation4 [shape = 's32[1]{0}', space=sflag, size = 0x4, scoped, tag = 'scoped memory for tpu_custom_call.1']
    %7 = vsyncpa [#allocation4], 0
    // Predicated region
    $region2: #{tpu_custom_call.1} parent=1 // pred_check
      _
    $region3: #{tpu_custom_call.1} parent=1 // pred_check_branch
      %9 = sbr.rel (0) target = $region5
    $region4: #{tpu_custom_call.1} parent=1 // pred_region
      _
    $region5: #{tpu_custom_call.1} parent=1 // pred_fallthru
      _
    // Predicated region
    $region6: #{tpu_custom_call.1} parent=1 // pred_check
      _
    $region7: #{tpu_custom_call.1} parent=1 // pred_check_branch
      %11 = sbr.rel (0) target = $region9
    $region8: #{tpu_custom_call.1} parent=1 // pred_region
      _
    $region9: #{tpu_custom_call.1} parent=1 // pred_fallthru
      _
    %p12 = scmp.eq.s32.totalorder 0, 0
    // Predicated region
    $region10: #{tpu_custom_call.1} parent=1 // pred_check
      %p13 = pneg %p12
    $region11: #{tpu_custom_call.1} parent=1 // pred_check_branch
      %15 = sbr.rel (%p13) target = $region13
    $region12: #{tpu_custom_call.1} parent=1 // pred_region
      %s16 = scalar_lea.smem [#allocation2], 0
      %17 = sst [smem:[%s16]] 0.0
    $region13: #{tpu_custom_call.1} parent=1 // pred_fallthru
      _
    %v18 = vld [vmem:[%s0] sm:$0xff]
    %v19 = vld [vmem:[%s1] sm:$0xff]
    %vm20 = vcmask 130048
    %v21 = vsel %vm20, %v18, -inf
    %22 = vmax.xlane.f32.xlu0 %v21
    %v23 = vpop.xlane.xlu0 %22
    %v24 = vsub.f32 %v18, %v23
    %v25 = vmul.f32 %v24, 1.442695
    %v26 = vpow.pop %v25
    %v27 = vsel %vm20, %v26, 0.0
    %28 = vadd.xlane.f32.xlu0 %v27
    %v29 = vpop.xlane.xlu0 %28
    %v30 = vlog2.pop %v29
    %v31 = vmul.f32 %v30, 0.6931472
    %v32 = vlaneseq
    %v33 = vand.u32 %v32, 127
    %34 = vset.pattern.permute.xlu0 0
    %35 = vperm.xlu0 %34, %v19
    %v36 = vpop.permute.xlu0 %35
    %vm37 = vcmp.eq.s32.totalorder %v33, %v36
    %v38 = vsel %vm37, 1, 0
    %v39 = vcvt.s32.f32 %v38
    %v40 = vmul.f32 %v39, %v18
    %v41 = vsel %vm20, %v40, 0.0
    %42 = vadd.xlane.f32.xlu0 %v41
    %v43 = vpop.xlane.xlu0 %42
    %v44 = vsub.f32 %v43, %v23
    %v45 = vsub.f32 %v44, %v31
    %v46 = vmul.f32 %v45, 1.442695
    %v47 = vpow.pop %v46
    %v48 = vsub.f32 1.0, %v47
    %v49 = vmul.f32 %v48, %v48
    %v50 = vmul.f32 %v49, -0.25
    %v51 = vadd.f32 %v47, 1e-09
    %v52 = vlog2.pop %v51
    %v53 = vmul.f32 %v52, 0.6931472
    %v54 = vmul.f32 %v50, %v53
    %s55 = smul.u32 0, 8
    %v56 = vlaneseq
    %v57 = vshrl.u32 %v56, 7
    %v58 = vstv %s55
    %v59 = vadd.s32 %v58, %v57
    %vm60 = vcmp.lt.s32.totalorder %v59, 8
    %v61 = vsel %vm60, %v54, 0.0
    %s62 = sld [smem:[#allocation2]]
    %vm63 = vcmask 7168
    %v64 = vsel %vm63, %v61, 0.0
    %65 = vadd.xlane.f32.xlu0 %v64
    %v66 = vpop.xlane.xlu0 %65
    %v67 = vrot.slane %v66, 4
    %v68 = vadd.f32 %v66, %v67
    %v69 = vrot.slane %v68, 2
    %v70 = vadd.f32 %v68, %v69
    %v71 = vrot.slane %v70, 1
    %v72 = vadd.f32 %v70, %v71
    %s73 = vtos %v72
    %s74 = sadd.f32 %s62, %s73
    %s75 = scalar_lea.smem [#allocation2], 0
    %76 = sst [smem:[%s75]] %s74
    // Predicated region
    $region14: #{tpu_custom_call.1} parent=1 // pred_check
      %p77 = pneg %p12
    $region15: #{tpu_custom_call.1} parent=1 // pred_check_branch
      %79 = sbr.rel (%p77) target = $region17
    $region16: #{tpu_custom_call.1} parent=1 // pred_region
      %s80 = sld [smem:[#allocation2]]
      %v81 = vrcp.pop 8.0
      %v82 = vmul.f32 8.0, %v81
      %v83 = vsub.f32 1.0, %v82
      %v84 = vmul.f32 %v81, %v83
      %v85 = vadd.f32 %v81, %v84
      %vm86 = vweird.f32 %v81
      %v87 = vsel %vm86, %v81, %v85
      %s88 = vtos %v87
      %s89 = smul.f32 %s80, %s88
      %s90 = scalar_lea.smem [#allocation3], 0
      %91 = sst [smem:[%s90]] %s89
    $region17: #{tpu_custom_call.1} parent=1 // pred_fallthru
      _
    // Predicated region
    $region18: #{tpu_custom_call.1} parent=1 // pred_check
      _
    $region19: #{tpu_custom_call.1} parent=1 // pred_check_branch
      %93 = sbr.rel (0) target = $region21
    $region20: #{tpu_custom_call.1} parent=1 // pred_region
      %95 = vsyncadd [#allocation4], 0
      %s97 = sshll.u32 %s2, 4
      %s98 = int_to_ptr.hbm [resolvable:$true] %s97
      %100 = dma.smem_to_hbm [#allocation3], 16, %s98, [#allocation4]
    $region21: #{tpu_custom_call.1} parent=1 // pred_fallthru
      _
    // Predicated region
    $region22: #{tpu_custom_call.1} parent=1 // pred_check
      _
    $region23: #{tpu_custom_call.1} parent=1 // pred_check_branch
      %102 = sbr.rel (0) target = $region25
    $region24: #{tpu_custom_call.1} parent=1 // pred_region
      %104 = dma.done [#allocation4], 16
    $region25: #{tpu_custom_call.1} parent=1 // pred_fallthru
      _
    %105 = sfence
    %106 = vsyncpa [#allocation4], 1

</llo_original>
